<compile_context>
chip_gen: v5e
topology: v5e:2x2
jax: 0.10.0
libtpu: 0.0.40
codegen_flags: <defaults>
</compile_context>

<pallas_src>
import functools

import jax
import jax.numpy as jnp
from jax.experimental import pallas as pl
from jax.experimental.pallas import tpu as pltpu


def _round_up(x, m):
    return (x + m - 1) // m * m


def classblock_kernel(x_ref, w1_ref, shift_ref, w2_ref, b2_ref, out_ref):
    # x_ref:     (tm, Dp)  bf16
    # w1_ref:    (Dp, Bp)  bf16   -- W1^T with BatchNorm scale folded in (resident)
    # shift_ref: (1,  Bp)  f32    -- b1*scale + (beta - mean*scale)  (folded BN shift)
    # w2_ref:    (Bp, tn)  bf16   -- W2^T tile over class dim
    # b2_ref:    (1,  tn)  f32
    # out_ref:   (tm, tn)  f32
    h = jnp.dot(x_ref[...], w1_ref[...], preferred_element_type=jnp.float32)
    h = h + shift_ref[...]
    # Dropout(p=0.5) is identity in eval mode; relu=False so no LeakyReLU.
    h = h.astype(jnp.bfloat16)
    out = jnp.dot(h, w2_ref[...], preferred_element_type=jnp.float32)
    out_ref[...] = (out + b2_ref[...]).astype(out_ref.dtype)


def prepare_params(params, eps=1e-5):
    """One-time preprocessing: BN fold, transpose, bf16 cast, lane padding."""
    w1, b1 = params["w1"], params["b1"]                    # (B, D), (B,)
    gamma, beta = params["gamma"], params["beta"]          # (B,), (B,)
    mean, var = params["run_mean"], params["run_var"]      # (B,), (B,)
    w2, b2 = params["w2"], params["b2"]                    # (C, B), (C,)

    B, D = w1.shape
    C = w2.shape[0]
    Dp = _round_up(D, 128)
    Bp = _round_up(B, 128)
    Cp = _round_up(C, 128)

    inv_std = 1.0 / jnp.sqrt(var + eps)
    scale = gamma * inv_std                                # (B,)
    shift = beta - mean * scale                            # (B,)

    # Fold BN scale into the columns of W1^T; fold b1 through BN into one shift.
    w1t_scaled = w1.T * scale[None, :]                     # (D, B)
    shift2 = b1 * scale + shift                            # (B,)

    w1p = jnp.zeros((Dp, Bp), jnp.bfloat16).at[:D, :B].set(w1t_scaled.astype(jnp.bfloat16))
    shiftp = jnp.zeros((1, Bp), jnp.float32).at[:, :B].set(shift2[None, :])
    w2p = jnp.zeros((Bp, Cp), jnp.bfloat16).at[:B, :C].set(w2.T.astype(jnp.bfloat16))
    b2p = jnp.zeros((1, Cp), jnp.float32).at[:, :C].set(b2[None, :])
    return {"w1p": w1p, "shiftp": shiftp, "w2p": w2p, "b2p": b2p}


@functools.partial(jax.jit, static_argnames=("class_num", "tm", "tn"))
def classblock_forward(x, w1p, shiftp, w2p, b2p, *, class_num, tm=256, tn=512):
    """x: (N, input_dim) f32. Returns (N, class_num) f32 (eval-mode ClassBlock)."""
    N, D = x.shape
    Dp, Bp = w1p.shape
    Cp = w2p.shape[1]

    # Tile sizes: tm capped by (padded) batch, tn lane-aligned and capped by padded class dim.
    tm = min(tm, _round_up(N, 8))
    tn = min(_round_up(tn, 128), Cp)
    while Cp % tn != 0:      # keep grid exact; Cp is a multiple of 128 so this terminates at 128
        tn -= 128
    Np = _round_up(N, tm)

    xp = jnp.pad(x.astype(jnp.bfloat16), ((0, Np - N), (0, Dp - D)))

    n_btiles = Np // tm
    n_ctiles = Cp // tn
    grid = (n_btiles, n_ctiles)

    # Advisory cost estimate (first matmul is recomputed per class tile).
    flops = 2 * Np * (Dp * Bp * n_ctiles + Bp * Cp)
    bytes_accessed = (xp.size * 2 + w1p.size * 2 + w2p.size * 2
                      + shiftp.size * 4 + b2p.size * 4 + Np * Cp * 4)
    cost = pl.CostEstimate(flops=flops, transcendentals=0, bytes_accessed=bytes_accessed)

    # VMEM budget: double-buffered x/out/W2 tiles + resident W1 + f32 intermediate h.
    vmem_need = (2 * tm * Dp * 2          # x tiles (bf16)
                 + 2 * tm * tn * 4        # out tiles (f32)
                 + Dp * Bp * 2            # W1' resident (bf16)
                 + 2 * Bp * tn * 2        # W2' tiles (bf16)
                 + 2 * Bp * 4 + 2 * tn * 4
                 + tm * Bp * 4)           # h intermediate (f32)
    vmem_limit = min(max(2 * vmem_need, 16 << 20), 60 << 20)   # stay under v7x 64 MiB

    out = pl.pallas_call(
        classblock_kernel,
        out_shape=jax.ShapeDtypeStruct((Np, Cp), jnp.float32),
        grid_spec=pltpu.PrefetchScalarGridSpec(
            num_scalar_prefetch=0,
            grid=grid,
            in_specs=[
                pl.BlockSpec((tm, Dp), lambda i, j: (i, 0)),   # x tile over batch
                pl.BlockSpec((Dp, Bp), lambda i, j: (0, 0)),   # W1' (resident)
                pl.BlockSpec((1, Bp), lambda i, j: (0, 0)),    # folded BN shift
                pl.BlockSpec((Bp, tn), lambda i, j: (0, j)),   # W2' tile over classes
                pl.BlockSpec((1, tn), lambda i, j: (0, j)),    # b2 tile
            ],
            out_specs=pl.BlockSpec((tm, tn), lambda i, j: (i, j)),
        ),
        compiler_params=pltpu.CompilerParams(
            dimension_semantics=("parallel", "parallel"),
            vmem_limit_bytes=vmem_limit,
        ),
        cost_estimate=cost,
    )(xp, w1p, shiftp, w2p, b2p)

    return out[:N, :class_num]


def reference_forward(x, params):
    eps = 1e-5
    h = x @ params["w1"].T + params["b1"]
    h = (h - params["run_mean"]) / jnp.sqrt(params["run_var"] + eps)
    h = h * params["gamma"] + params["beta"]
    # dropout: identity (eval)
    return h @ params["w2"].T + params["b2"]


if __name__ == "__main__":
    # Small shapes consistent with the module; deliberately NOT lane/tile aligned so the
    # padding paths (N, D, C) are exercised: ClassBlock(input_dim=96, class_num=75, num_bottleneck=128).
    N, input_dim, num_bottleneck, class_num = 300, 96, 128, 75

    key = jax.random.PRNGKey(0)
    k = jax.random.split(key, 8)
    # Deterministic synthetic params (kaiming-ish scale for add_block, small normal for classifier).
    params = {
        "w1": jax.random.normal(k[0], (num_bottleneck, input_dim), jnp.float32)
              * jnp.sqrt(2.0 / input_dim),
        "b1": 0.01 * jax.random.normal(k[6], (num_bottleneck,), jnp.float32),
        "gamma": jnp.ones((num_bottleneck,), jnp.float32)
                 + 0.02 * jax.random.normal(k[1], (num_bottleneck,), jnp.float32),
        "beta": 0.01 * jax.random.normal(k[7], (num_bottleneck,), jnp.float32),
        "run_mean": 0.1 * jax.random.normal(k[2], (num_bottleneck,), jnp.float32),
        "run_var": jnp.abs(1.0 + 0.1 * jax.random.normal(k[3], (num_bottleneck,), jnp.float32)),
        "w2": 0.001 * jax.random.normal(k[4], (class_num, num_bottleneck), jnp.float32),
        "b2": jnp.zeros((class_num,), jnp.float32),
    }

    x = jax.random.normal(k[5], (N, input_dim), jnp.float32)

    prepped = prepare_params(params)                       # one-time parameter preprocessing
    out = classblock_forward(x, prepped["w1p"], prepped["shiftp"],
                             prepped["w2p"], prepped["b2p"], class_num=class_num)
    out = jax.block_until_ready(out)

    ref = reference_forward(x, params)
    assert out.shape == (N, class_num)
    # bf16 matmul inputs with f32 accumulation -> relaxed tolerance vs. the f32 reference.
    assert jnp.allclose(out, ref, atol=5e-3, rtol=5e-2), "mismatch vs reference"

    # TODO(synk): training-mode BatchNorm batch-stats and Dropout masking are not implemented
    # (eval-mode inference semantics only).
    print("KERNEL_OK")
</pallas_src>

<mosaic_0001>
module attributes {stable_mosaic.version = 11 : i64} {
  func.func @classblock_kernel(%arg0: i32, %arg1: i32, %arg2: memref<256x128xbf16, #tpu.memory_space<vmem>>, %arg3: memref<128x128xbf16, #tpu.memory_space<vmem>>, %arg4: memref<1x128xf32, #tpu.memory_space<vmem>>, %arg5: memref<128x128xbf16, #tpu.memory_space<vmem>>, %arg6: memref<1x128xf32, #tpu.memory_space<vmem>>, %arg7: memref<256x128xf32, #tpu.memory_space<vmem>>) attributes {dimension_semantics = [#tpu.dimension_semantics<parallel>, #tpu.dimension_semantics<parallel>], iteration_bounds = array<i64: 2, 1>, scalar_prefetch = 0 : i64, scratch_operands = 0 : i64, tpu.core_type = #tpu.core_type<tc>, window_params = [{transform_indices = @transform_0, window_bounds = array<i64: 256, 128>}, {pipeline_mode = #tpu.pipeline_mode<synchronous>, transform_indices = @transform_1, window_bounds = array<i64: 128, 128>}, {pipeline_mode = #tpu.pipeline_mode<synchronous>, transform_indices = @transform_2, window_bounds = array<i64: 1, 128>}, {transform_indices = @transform_3, window_bounds = array<i64: 128, 128>}, {transform_indices = @transform_4, window_bounds = array<i64: 1, 128>}, {transform_indices = @transform_5, window_bounds = array<i64: 256, 128>}]} {
    %c0 = arith.constant 0 : index
    %c0_0 = arith.constant 0 : index
    %0 = vector.load %arg2[%c0, %c0_0] : memref<256x128xbf16, #tpu.memory_space<vmem>>, vector<256x128xbf16>
    %c0_1 = arith.constant 0 : index
    %c0_2 = arith.constant 0 : index
    %1 = vector.load %arg3[%c0_1, %c0_2] : memref<128x128xbf16, #tpu.memory_space<vmem>>, vector<128x128xbf16>
    %cst = arith.constant dense<0.000000e+00> : vector<256x128xf32>
    %2 = tpu.matmul %0, %1, %cst {dimension_numbers = #tpu.dot_dimension_numbers<[1], [0], [0], [1], [0, 0, 1, 1], [], []>} : vector<256x128xbf16>, vector<128x128xbf16>, vector<256x128xf32> -> vector<256x128xf32>
    %c0_3 = arith.constant 0 : index
    %c0_4 = arith.constant 0 : index
    %3 = vector.load %arg4[%c0_3, %c0_4] : memref<1x128xf32, #tpu.memory_space<vmem>>, vector<1x128xf32>
    %4 = vector.broadcast %3 : vector<1x128xf32> to vector<256x128xf32>
    %5 = arith.addf %2, %4 : vector<256x128xf32>
    %6 = arith.truncf %5 : vector<256x128xf32> to vector<256x128xbf16>
    %c0_5 = arith.constant 0 : index
    %c0_6 = arith.constant 0 : index
    %7 = vector.load %arg5[%c0_5, %c0_6] : memref<128x128xbf16, #tpu.memory_space<vmem>>, vector<128x128xbf16>
    %cst_7 = arith.constant dense<0.000000e+00> : vector<256x128xf32>
    %8 = tpu.matmul %6, %7, %cst_7 {dimension_numbers = #tpu.dot_dimension_numbers<[1], [0], [0], [1], [0, 0, 1, 1], [], []>} : vector<256x128xbf16>, vector<128x128xbf16>, vector<256x128xf32> -> vector<256x128xf32>
    %c0_8 = arith.constant 0 : index
    %c0_9 = arith.constant 0 : index
    %9 = vector.load %arg6[%c0_8, %c0_9] : memref<1x128xf32, #tpu.memory_space<vmem>>, vector<1x128xf32>
    %10 = vector.broadcast %9 : vector<1x128xf32> to vector<256x128xf32>
    %11 = arith.addf %8, %10 : vector<256x128xf32>
    %c0_10 = arith.constant 0 : index
    %c0_11 = arith.constant 0 : index
    %12 = vector.load %arg7[%c0_10, %c0_11] : memref<256x128xf32, #tpu.memory_space<vmem>>, vector<256x128xf32>
    tpu.vector_store %arg7[%c0_10, %c0_11], %11 {strides = array<i32>} : memref<256x128xf32, #tpu.memory_space<vmem>>, vector<256x128xf32>,
    return
  }
  func.func @transform_0(%arg0: i32, %arg1: i32) -> (i32, i32) {
    %c0_i32 = arith.constant 0 : i32
    %c0_i32_0 = arith.constant 0 : i32
    return %arg0, %c0_i32 : i32, i32
  }
  func.func @transform_1(%arg0: i32, %arg1: i32) -> (i32, i32) {
    %c0_i32 = arith.constant 0 : i32
    %c0_i32_0 = arith.constant 0 : i32
    %c0_i32_1 = arith.constant 0 : i32
    return %c0_i32, %c0_i32_0 : i32, i32
  }
  func.func @transform_2(%arg0: i32, %arg1: i32) -> (i32, i32) {
    %c0_i32 = arith.constant 0 : i32
    %c0_i32_0 = arith.constant 0 : i32
    %c0_i32_1 = arith.constant 0 : i32
    return %c0_i32, %c0_i32_0 : i32, i32
  }
  func.func @transform_3(%arg0: i32, %arg1: i32) -> (i32, i32) {
    %c0_i32 = arith.constant 0 : i32
    %c0_i32_0 = arith.constant 0 : i32
    return %c0_i32, %arg1 : i32, i32
  }
  func.func @transform_4(%arg0: i32, %arg1: i32) -> (i32, i32) {
    %c0_i32 = arith.constant 0 : i32
    %c0_i32_0 = arith.constant 0 : i32
    return %c0_i32, %arg1 : i32, i32
  }
  func.func @transform_5(%arg0: i32, %arg1: i32) -> (i32, i32) {
    %c0_i32 = arith.constant 0 : i32
    return %arg0, %arg1 : i32, i32
  }
}

</mosaic_0001>

<llo_original>
// kernel: classblock_forward.1
$region0: #{classblock_forward.1}
  #allocation0 [shape = 'u32[]', space=smem, size = 0x4, offset = 0x4, fixed_abs, tag = 'smem constant byte address 0x4 - core index']
  #allocation1 [shape = 'u32[72,128]{1,0:T(1,128)}', space=vmem, size = 0x9000, scoped, tag = 'internal scratch']
  %s0 = inlined_call_operand.vmem [shape: bf16[512,128], index: 0, kind: input, shape index: {}]
  %s1 = inlined_call_operand.vmem [shape: bf16[128,128], index: 1, kind: input, shape index: {}]
  %s2 = inlined_call_operand.vmem [shape: f32[1,128], index: 2, kind: input, shape index: {}]
  %s3 = inlined_call_operand.vmem [shape: bf16[128,128], index: 3, kind: input, shape index: {}]
  %s4 = inlined_call_operand.vmem [shape: f32[1,128], index: 4, kind: input, shape index: {}]
  %s5 = inlined_call_operand.vmem [shape: f32[512,128], index: 5, kind: output, shape index: {}]
  %s6 = sld [smem:[#allocation0]]
  $region53: #{classblock_forward.1} parent=0
    _
  %s8 = ssub.s32 1, %s6
  %s9 = scalar_select 0, %s8, %s6
  loop: start=0, step=1, limit=4
  $region2: #{classblock_forward.1} parent=0 // loop_pre_header
    _
  $region3: #{classblock_forward.1} parent=0 // loop_header
    %s11 = sphi 0, %s15
    %p12 = scmp.ge.s32.totalorder %s11, 4
    %s18 = sphi 0, %s30
    %s19 = sphi 0, %s26
    %s20 = sphi 0, %s18
    %s21 = sphi 0, %s19
    %s22 = sphi 0, %s20
    %s23 = sphi 0, %s21
    %s33 = sphi 0, %s35
    %s36 = sphi 0, %s33
    %s37 = sphi 0, %s36
    %s53 = sphi 0, %s37
    %s57 = sphi 0, %s57
    %s59 = sphi 0, %s57
    %s60 = sphi 0, %s59
    %s74 = sphi 0, %s60
    %s78 = sphi 0, %s78
    %s80 = sphi 0, %s78
    %s81 = sphi 0, %s80
    %s95 = sphi 0, %s81
    %s101 = sphi 0, %s103
    %s104 = sphi 0, %s101
    %s105 = sphi 0, %s104
    %s121 = sphi 0, %s105
    %s127 = sphi 0, %s129
    %s130 = sphi 0, %s127
    %s131 = sphi 0, %s130
    %s147 = sphi 0, %s131
    %s155 = sphi 0, %s157
    %s158 = sphi 0, %s155
    %s159 = sphi 0, %s158
    %s175 = sphi 0, %s159
  $region4: #{classblock_forward.1} parent=0 // loop_header_branch
    %14 = sbr.rel (%p12) target = $region8
  $region5: #{classblock_forward.1} parent=0 // loop_body
    %s16 = ssub.s32 %s11, 1
    %s17 = ssub.s32 %s11, 2
    %s24 = sadd.s32 1, %s19
    %p25 = scmp.ge.s32.totalorder %s24, 1
    %s26 = scalar_select %p25, 0, %s24
    %s27 = sadd.s32 1, %s18
    %s28 = scalar_select %p25, %s27, %s18
    %p29 = scmp.ge.s32.totalorder %s28, 2
    %s30 = scalar_select %p29, 0, %s28
    %s31 = ssub.s32 %s18, %s30
    %p32 = scmp.eq.s32.totalorder %s31, 0
    %s34 = sadd.s32 %s33, 1
    %s35 = scalar_select %p32, %s33, %s34
    %p38 = pneg %p32
    %p39 = scmp.eq.s32.totalorder %s11, 1
    %p40 = por %p38, %p39
    %p41 = scmp.ne.s32.totalorder %s33, %s36
    %p42 = scmp.eq.s32.totalorder %s11, 0
    %p43 = por %p41, %p42
    %p44 = scmp.ne.s32.totalorder %s33, %s36
    %p45 = scmp.eq.s32.totalorder %s16, 1
    %p46 = por %p44, %p45
    %p47 = scmp.ne.s32.totalorder %s36, %s37
    %p48 = scmp.eq.s32.totalorder %s16, 0
    %p49 = por %p47, %p48
    %p50 = scmp.ne.s32.totalorder %s36, %s37
    %p51 = scmp.eq.s32.totalorder %s17, 1
    %p52 = por %p50, %p51
    %p54 = scmp.ne.s32.totalorder %s37, %s53
    %p55 = scmp.eq.s32.totalorder %s17, 0
    %p56 = por %p54, %p55
    %s58 = sadd.s32 %s57, 1
    %p61 = scmp.eq.s32.totalorder %s11, 1
    %p62 = scmp.ne.s32.totalorder %s57, %s59
    %p63 = scmp.eq.s32.totalorder %s11, 0
    %p64 = por %p62, %p63
    %p65 = scmp.ne.s32.totalorder %s57, %s59
    %p66 = scmp.eq.s32.totalorder %s16, 1
    %p67 = por %p65, %p66
    %p68 = scmp.ne.s32.totalorder %s59, %s60
    %p69 = scmp.eq.s32.totalorder %s16, 0
    %p70 = por %p68, %p69
    %p71 = scmp.ne.s32.totalorder %s59, %s60
    %p72 = scmp.eq.s32.totalorder %s17, 1
    %p73 = por %p71, %p72
    %p75 = scmp.ne.s32.totalorder %s60, %s74
    %p76 = scmp.eq.s32.totalorder %s17, 0
    %p77 = por %p75, %p76
    %s79 = sadd.s32 %s78, 1
    %p82 = scmp.eq.s32.totalorder %s11, 1
    %p83 = scmp.ne.s32.totalorder %s78, %s80
    %p84 = scmp.eq.s32.totalorder %s11, 0
    %p85 = por %p83, %p84
    %p86 = scmp.ne.s32.totalorder %s78, %s80
    %p87 = scmp.eq.s32.totalorder %s16, 1
    %p88 = por %p86, %p87
    %p89 = scmp.ne.s32.totalorder %s80, %s81
    %p90 = scmp.eq.s32.totalorder %s16, 0
    %p91 = por %p89, %p90
    %p92 = scmp.ne.s32.totalorder %s80, %s81
    %p93 = scmp.eq.s32.totalorder %s17, 1
    %p94 = por %p92, %p93
    %p96 = scmp.ne.s32.totalorder %s81, %s95
    %p97 = scmp.eq.s32.totalorder %s17, 0
    %p98 = por %p96, %p97
    %s99 = ssub.s32 %s19, %s26
    %p100 = scmp.eq.s32.totalorder %s99, 0
    %s102 = sadd.s32 %s101, 1
    %s103 = scalar_select %p100, %s101, %s102
    %p106 = pneg %p100
    %p107 = scmp.eq.s32.totalorder %s11, 1
    %p108 = por %p106, %p107
    %p109 = scmp.ne.s32.totalorder %s101, %s104
    %p110 = scmp.eq.s32.totalorder %s11, 0
    %p111 = por %p109, %p110
    %p112 = scmp.ne.s32.totalorder %s101, %s104
    %p113 = scmp.eq.s32.totalorder %s16, 1
    %p114 = por %p112, %p113
    %p115 = scmp.ne.s32.totalorder %s104, %s105
    %p116 = scmp.eq.s32.totalorder %s16, 0
    %p117 = por %p115, %p116
    %p118 = scmp.ne.s32.totalorder %s104, %s105
    %p119 = scmp.eq.s32.totalorder %s17, 1
    %p120 = por %p118, %p119
    %p122 = scmp.ne.s32.totalorder %s105, %s121
    %p123 = scmp.eq.s32.totalorder %s17, 0
    %p124 = por %p122, %p123
    %s125 = ssub.s32 %s19, %s26
    %p126 = scmp.eq.s32.totalorder %s125, 0
    %s128 = sadd.s32 %s127, 1
    %s129 = scalar_select %p126, %s127, %s128
    %p132 = pneg %p126
    %p133 = scmp.eq.s32.totalorder %s11, 1
    %p134 = por %p132, %p133
    %p135 = scmp.ne.s32.totalorder %s127, %s130
    %p136 = scmp.eq.s32.totalorder %s11, 0
    %p137 = por %p135, %p136
    %p138 = scmp.ne.s32.totalorder %s127, %s130
    %p139 = scmp.eq.s32.totalorder %s16, 1
    %p140 = por %p138, %p139
    %p141 = scmp.ne.s32.totalorder %s130, %s131
    %p142 = scmp.eq.s32.totalorder %s16, 0
    %p143 = por %p141, %p142
    %p144 = scmp.ne.s32.totalorder %s130, %s131
    %p145 = scmp.eq.s32.totalorder %s17, 1
    %p146 = por %p144, %p145
    %p148 = scmp.ne.s32.totalorder %s131, %s147
    %p149 = scmp.eq.s32.totalorder %s17, 0
    %p150 = por %p148, %p149
    %s151 = ssub.s32 %s18, %s30
    %s152 = ssub.s32 %s19, %s26
    %s153 = sor.u32 %s151, %s152
    %p154 = scmp.eq.s32.totalorder %s153, 0
    %s156 = sadd.s32 %s155, 1
    %s157 = scalar_select %p154, %s155, %s156
    %p160 = pneg %p154
    %p161 = scmp.eq.s32.totalorder %s11, 1
    %p162 = por %p160, %p161
    %p163 = scmp.ne.s32.totalorder %s155, %s158
    %p164 = scmp.eq.s32.totalorder %s11, 0
    %p165 = por %p163, %p164
    %p166 = scmp.ne.s32.totalorder %s155, %s158
    %p167 = scmp.eq.s32.totalorder %s16, 1
    %p168 = por %p166, %p167
    %p169 = scmp.ne.s32.totalorder %s158, %s159
    %p170 = scmp.eq.s32.totalorder %s16, 0
    %p171 = por %p169, %p170
    %p172 = scmp.ne.s32.totalorder %s158, %s159
    %p173 = scmp.eq.s32.totalorder %s17, 1
    %p174 = por %p172, %p173
    %p176 = scmp.ne.s32.totalorder %s159, %s175
    %p177 = scmp.eq.s32.totalorder %s17, 0
    %p178 = por %p176, %p177
    %p179 = scmp.le.s32.totalorder 1, %s11
    %p180 = scmp.lt.s32.totalorder %s11, 3
    %p181 = pnand %p179, %p180
    %p182 = pneg %p181
    // Predicated region
    $region9: #{classblock_forward.1} parent=5 // pred_check
      _
    $region10: #{classblock_forward.1} parent=5 // pred_check_branch
      %184 = sbr.rel (%p181) target = $region12
    $region11: #{classblock_forward.1} parent=5 // pred_region
      %s185 = ssub.s32 %s11, 1
      // Predicated region
      $region13: #{classblock_forward.1} parent=11 // pred_check
        %p186 = pneg %p70
      $region14: #{classblock_forward.1} parent=11 // pred_check_branch
        %188 = sbr.rel (%p186) target = $region16
      $region15: #{classblock_forward.1} parent=11 // pred_region
        _
      $region16: #{classblock_forward.1} parent=11 // pred_fallthru
        _
      // Predicated region
      $region17: #{classblock_forward.1} parent=11 // pred_check
        %p189 = pneg %p91
      $region18: #{classblock_forward.1} parent=11 // pred_check_branch
        %191 = sbr.rel (%p189) target = $region20
      $region19: #{classblock_forward.1} parent=11 // pred_region
        _
      $region20: #{classblock_forward.1} parent=11 // pred_fallthru
        _
      // Predicated region
      $region21: #{classblock_forward.1} parent=11 // pred_check
        %p192 = pneg %p117
      $region22: #{classblock_forward.1} parent=11 // pred_check_branch
        %194 = sbr.rel (%p192) target = $region24
      $region23: #{classblock_forward.1} parent=11 // pred_region
        %p195 = scmp.lt.s32.totalorder %s21, 0
        %s196 = scalar_select %p195, %s21, 0
        %s197 = smul.addr %s196, 4
        %s198 = scalar_lea.vmem %s3, %s197
      $region24: #{classblock_forward.1} parent=11 // pred_fallthru
        _
      // Predicated region
      $region25: #{classblock_forward.1} parent=11 // pred_check
        %p199 = pneg %p143
      $region26: #{classblock_forward.1} parent=11 // pred_check_branch
        %201 = sbr.rel (%p199) target = $region28
      $region27: #{classblock_forward.1} parent=11 // pred_region
        %p202 = scmp.lt.s32.totalorder %s21, 0
        %s203 = scalar_select %p202, %s21, 0
        %s204 = scalar_lea.vmem %s4, %s203
      $region28: #{classblock_forward.1} parent=11 // pred_fallthru
        _
    $region12: #{classblock_forward.1} parent=5 // pred_fallthru
      _
    %p205 = scmp.lt.s32.totalorder %s11, 2
    // Predicated region
    $region29: #{classblock_forward.1} parent=5 // pred_check
      %p206 = pneg %p205
    $region30: #{classblock_forward.1} parent=5 // pred_check_branch
      %208 = sbr.rel (%p206) target = $region32
    $region31: #{classblock_forward.1} parent=5 // pred_region
      // Predicated region
      $region33: #{classblock_forward.1} parent=31 // pred_check
        %p209 = pneg %p43
      $region34: #{classblock_forward.1} parent=31 // pred_check_branch
        %211 = sbr.rel (%p209) target = $region36
      $region35: #{classblock_forward.1} parent=31 // pred_region
        %s212 = smul.u32 32, %s18
        %p213 = scmp.lt.s32.totalorder %s212, 63
        %s214 = scalar_select %p213, %s212, 63
        %s215 = smul.addr %s214, 4
        %s216 = scalar_lea.vmem %s0, %s215
        %s217 = smul.u32 32, %s18
      $region36: #{classblock_forward.1} parent=31 // pred_fallthru
        _
    $region32: #{classblock_forward.1} parent=5 // pred_fallthru
      _
    %p218 = scmp.le.s32.totalorder 1, %s11
    %p219 = scmp.lt.s32.totalorder %s11, 3
    %p220 = pnand %p218, %p219
    %p221 = pneg %p220
    // Predicated region
    $region37: #{classblock_forward.1} parent=5 // pred_check
      _
    $region38: #{classblock_forward.1} parent=5 // pred_check_branch
      %223 = sbr.rel (%p220) target = $region40
    $region39: #{classblock_forward.1} parent=5 // pred_region
      %s224 = ssub.s32 %s11, 1
      %s225 = smul.u32 32, %s20
      %p226 = scmp.lt.s32.totalorder %s225, 63
      %s227 = scalar_select %p226, %s225, 63
      %s228 = smul.addr %s227, 4
      %s229 = scalar_lea.vmem %s0, %s228
      %p230 = pneg %p49
      %p231 = pneg %p46
      %p232 = pneg %p70
      %p233 = pneg %p67
      %p234 = pneg %p91
      %p235 = pneg %p88
      %p236 = scmp.lt.s32.totalorder %s21, 0
      %s237 = scalar_select %p236, %s21, 0
      %s238 = smul.addr %s237, 4
      %s239 = scalar_lea.vmem %s3, %s238
      %p240 = pneg %p117
      %p241 = pneg %p114
      %p242 = scmp.lt.s32.totalorder %s21, 0
      %s243 = scalar_select %p242, %s21, 0
      %s244 = scalar_lea.vmem %s4, %s243
      %p245 = pneg %p143
      %p246 = pneg %p140
      %p247 = pneg %p171
      %p248 = pneg %p168
      %s249 = smul.u32 32, %s20
      %p250 = scmp.lt.s32.totalorder %s249, 63
      %s251 = scalar_select %p250, %s249, 63
      %p252 = scmp.lt.s32.totalorder %s21, 0
      %s253 = scalar_select %p252, %s21, 0
      %s254 = sadd.s32 %s253, %s251
      %s255 = smul.addr %s254, 8
      %s256 = scalar_lea.vmem %s5, %s255
      %s257 = smul.u32 32, %s20
      %p258 = scmp.lt.s32.totalorder %s257, 63
      %s259 = scalar_select %p258, %s257, 63
      %s260 = smul.addr %s259, 4
      %s261 = scalar_lea.vmem %s0, %s260
      %s262 = smul.u32 32, %s20
      %p263 = scmp.lt.s32.totalorder %s21, 0
      %s264 = scalar_select %p263, %s21, 0
      %s265 = smul.addr %s264, 4
      %s266 = scalar_lea.vmem %s3, %s265
      %p267 = scmp.lt.s32.totalorder %s21, 0
      %s268 = scalar_select %p267, %s21, 0
      %s269 = scalar_lea.vmem %s4, %s268
      %s270 = smul.u32 32, %s20
      %p271 = scmp.lt.s32.totalorder %s270, 63
      %s272 = scalar_select %p271, %s270, 63
      %p273 = scmp.lt.s32.totalorder %s21, 0
      %s274 = scalar_select %p273, %s21, 0
      %s275 = sadd.s32 %s274, %s272
      %s276 = smul.addr %s275, 8
      %s277 = scalar_lea.vmem %s5, %s276
      %s278 = smul.u32 32, %s20
      %v279 = vld [vmem:[%s261] sm:$0xf]
      %v280 = vld [vmem:[%s261 + $0x4] sm:$0xf]
      %v281 = vld [vmem:[%s261 + $0x8] sm:$0xf]
      %v282 = vld [vmem:[%s261 + $0xc] sm:$0xf]
      %v283 = vld [vmem:[%s261 + $0x10] sm:$0xf]
      %v284 = vld [vmem:[%s261 + $0x14] sm:$0xf]
      %v285 = vld [vmem:[%s261 + $0x18] sm:$0xf]
      %v286 = vld [vmem:[%s261 + $0x1c] sm:$0xf]
      %v287 = vld [vmem:[%s261 + $0x20] sm:$0xf]
      %v288 = vld [vmem:[%s261 + $0x24] sm:$0xf]
      %v289 = vld [vmem:[%s261 + $0x28] sm:$0xf]
      %v290 = vld [vmem:[%s261 + $0x2c] sm:$0xf]
      %v291 = vld [vmem:[%s261 + $0x30] sm:$0xf]
      %v292 = vld [vmem:[%s261 + $0x34] sm:$0xf]
      %v293 = vld [vmem:[%s261 + $0x38] sm:$0xf]
      %v294 = vld [vmem:[%s261 + $0x3c] sm:$0xf]
      %v295 = vld [vmem:[%s261 + $0x40] sm:$0xf]
      %v296 = vld [vmem:[%s261 + $0x44] sm:$0xf]
      %v297 = vld [vmem:[%s261 + $0x48] sm:$0xf]
      %v298 = vld [vmem:[%s261 + $0x4c] sm:$0xf]
      %v299 = vld [vmem:[%s261 + $0x50] sm:$0xf]
      %v300 = vld [vmem:[%s261 + $0x54] sm:$0xf]
      %v301 = vld [vmem:[%s261 + $0x58] sm:$0xf]
      %v302 = vld [vmem:[%s261 + $0x5c] sm:$0xf]
      %v303 = vld [vmem:[%s261 + $0x60] sm:$0xf]
      %v304 = vld [vmem:[%s261 + $0x64] sm:$0xf]
      %v305 = vld [vmem:[%s261 + $0x68] sm:$0xf]
      %v306 = vld [vmem:[%s261 + $0x6c] sm:$0xf]
      %v307 = vld [vmem:[%s261 + $0x70] sm:$0xf]
      %v308 = vld [vmem:[%s261 + $0x74] sm:$0xf]
      %v309 = vld [vmem:[%s261 + $0x78] sm:$0xf]
      %v310 = vld [vmem:[%s261 + $0x7c] sm:$0xf]
      %v311 = vld [vmem:[%s1] sm:$0xf]
      %v312 = vld [vmem:[%s1 + $0x4] sm:$0xf]
      %v313 = vld [vmem:[%s1 + $0x8] sm:$0xf]
      %v314 = vld [vmem:[%s1 + $0xc] sm:$0xf]
      %v315 = vld [vmem:[%s1 + $0x10] sm:$0xf]
      %v316 = vld [vmem:[%s1 + $0x14] sm:$0xf]
      %v317 = vld [vmem:[%s1 + $0x18] sm:$0xf]
      %v318 = vld [vmem:[%s1 + $0x1c] sm:$0xf]
      %v319 = vld [vmem:[%s1 + $0x20] sm:$0xf]
      %v320 = vld [vmem:[%s1 + $0x24] sm:$0xf]
      %v321 = vld [vmem:[%s1 + $0x28] sm:$0xf]
      %v322 = vld [vmem:[%s1 + $0x2c] sm:$0xf]
      %v323 = vld [vmem:[%s1 + $0x30] sm:$0xf]
      %v324 = vld [vmem:[%s1 + $0x34] sm:$0xf]
      %v325 = vld [vmem:[%s1 + $0x38] sm:$0xf]
      %v326 = vld [vmem:[%s1 + $0x3c] sm:$0xf]
      %v327 = vld [vmem:[%s2] sm:$0x1]
      %v329 = vperm.slane %v327, 0
      %v363 = vunpack.c.l.b16 %v279
      %v364 = vunpack.c.l.b16 %v280
      %v365 = vunpack.c.l.b16 %v281
      %v366 = vunpack.c.l.b16 %v282
      %v367 = vunpack.c.l.b16 %v283
      %v368 = vunpack.c.l.b16 %v284
      %v369 = vunpack.c.l.b16 %v285
      %v370 = vunpack.c.l.b16 %v286
      %v371 = vunpack.c.l.b16 %v287
      %v372 = vunpack.c.l.b16 %v288
      %v373 = vunpack.c.l.b16 %v289
      %v374 = vunpack.c.l.b16 %v290
      %v375 = vunpack.c.l.b16 %v291
      %v376 = vunpack.c.l.b16 %v292
      %v377 = vunpack.c.l.b16 %v293
      %v378 = vunpack.c.l.b16 %v294
      %v379 = vunpack.c.l.b16 %v295
      %v380 = vunpack.c.l.b16 %v296
      %v381 = vunpack.c.l.b16 %v297
      %v382 = vunpack.c.l.b16 %v298
      %v383 = vunpack.c.l.b16 %v299
      %v384 = vunpack.c.l.b16 %v300
      %v385 = vunpack.c.l.b16 %v301
      %v386 = vunpack.c.l.b16 %v302
      %v387 = vunpack.c.l.b16 %v303
      %v388 = vunpack.c.l.b16 %v304
      %v389 = vunpack.c.l.b16 %v305
      %v390 = vunpack.c.l.b16 %v306
      %v391 = vunpack.c.l.b16 %v307
      %v392 = vunpack.c.l.b16 %v308
      %v393 = vunpack.c.l.b16 %v309
      %v394 = vunpack.c.l.b16 %v310
      %v395 = vpack.c.b16 %v364, %v363
      %v396 = vpack.c.b16 %v366, %v365
      %v397 = vpack.c.b16 %v368, %v367
      %v398 = vpack.c.b16 %v370, %v369
      %v399 = vpack.c.b16 %v372, %v371
      %v400 = vpack.c.b16 %v374, %v373
      %v401 = vpack.c.b16 %v376, %v375
      %v402 = vpack.c.b16 %v378, %v377
      %v403 = vpack.c.b16 %v380, %v379
      %v404 = vpack.c.b16 %v382, %v381
      %v405 = vpack.c.b16 %v384, %v383
      %v406 = vpack.c.b16 %v386, %v385
      %v407 = vpack.c.b16 %v388, %v387
      %v408 = vpack.c.b16 %v390, %v389
      %v409 = vpack.c.b16 %v392, %v391
      %v410 = vpack.c.b16 %v394, %v393
      %v443 = vunpack.c.l.b16 %v311
      %v444 = vunpack.c.l.b16 %v312
      %v445 = vunpack.c.l.b16 %v313
      %v446 = vunpack.c.l.b16 %v314
      %v447 = vunpack.c.l.b16 %v315
      %v448 = vunpack.c.l.b16 %v316
      %v449 = vunpack.c.l.b16 %v317
      %v450 = vunpack.c.l.b16 %v318
      %v451 = vunpack.c.l.b16 %v319
      %v452 = vunpack.c.l.b16 %v320
      %v453 = vunpack.c.l.b16 %v321
      %v454 = vunpack.c.l.b16 %v322
      %v455 = vunpack.c.l.b16 %v323
      %v456 = vunpack.c.l.b16 %v324
      %v457 = vunpack.c.l.b16 %v325
      %v458 = vunpack.c.l.b16 %v326
      %v459 = vpack.c.b16 %v444, %v443
      %v460 = vpack.c.b16 %v446, %v445
      %v461 = vpack.c.b16 %v448, %v447
      %v462 = vpack.c.b16 %v450, %v449
      %v463 = vpack.c.b16 %v452, %v451
      %v464 = vpack.c.b16 %v454, %v453
      %v465 = vpack.c.b16 %v456, %v455
      %v466 = vpack.c.b16 %v458, %v457
      %475 = vmatpush.bf16.msra.mxu0 %v466
      %476 = vmatpush.bf16.msra.mxu0 %v465
      %477 = vmatpush.bf16.msra.mxu0 %v464
      %478 = vmatpush.bf16.msra.mxu0 %v463
      %479 = vmatpush.bf16.msra.mxu0 %v462
      %480 = vmatpush.bf16.msra.mxu0 %v461
      %481 = vmatpush.bf16.msra.mxu0 %v460
      %482 = vmatpush.bf16.msra.mxu0 %v459
      %483 = vmatmul.bf16.gmra.mxu0 %v395
      %v484 = vpop.f32.mrf.mxu0
      %v485 = vadd.f32 %v329, %v484
      %v486 = vpop.f32.mrf.mxu0
      %v487 = vadd.f32 %v329, %v486
      %488 = vmatmul.bf16.gmra.mxu0 %v396
      %v489 = vpop.f32.mrf.mxu0
      %v490 = vadd.f32 %v329, %v489
      %v491 = vpop.f32.mrf.mxu0
      %v492 = vadd.f32 %v329, %v491
      %493 = vmatmul.bf16.gmra.mxu0 %v397
      %v494 = vpop.f32.mrf.mxu0
      %v495 = vadd.f32 %v329, %v494
      %v496 = vpop.f32.mrf.mxu0
      %v497 = vadd.f32 %v329, %v496
      %498 = vmatmul.bf16.gmra.mxu0 %v398
      %v499 = vpop.f32.mrf.mxu0
      %v500 = vadd.f32 %v329, %v499
      %v501 = vpop.f32.mrf.mxu0
      %v502 = vadd.f32 %v329, %v501
      %503 = vmatmul.bf16.gmra.mxu0 %v399
      %v504 = vpop.f32.mrf.mxu0
      %v505 = vadd.f32 %v329, %v504
      %v506 = vpop.f32.mrf.mxu0
      %v507 = vadd.f32 %v329, %v506
      %508 = vmatmul.bf16.gmra.mxu0 %v400
      %v509 = vpop.f32.mrf.mxu0
      %v510 = vadd.f32 %v329, %v509
      %v511 = vpop.f32.mrf.mxu0
      %v512 = vadd.f32 %v329, %v511
      %513 = vmatmul.bf16.gmra.mxu0 %v401
      %v514 = vpop.f32.mrf.mxu0
      %v515 = vadd.f32 %v329, %v514
      %v516 = vpop.f32.mrf.mxu0
      %v517 = vadd.f32 %v329, %v516
      %518 = vmatmul.bf16.gmra.mxu0 %v402
      %v519 = vpop.f32.mrf.mxu0
      %v520 = vadd.f32 %v329, %v519
      %v521 = vpop.f32.mrf.mxu0
      %v522 = vadd.f32 %v329, %v521
      %523 = vmatmul.bf16.gmra.mxu0 %v403
      %v524 = vpop.f32.mrf.mxu0
      %v525 = vadd.f32 %v329, %v524
      %v526 = vpop.f32.mrf.mxu0
      %v527 = vadd.f32 %v329, %v526
      %528 = vmatmul.bf16.gmra.mxu0 %v404
      %v529 = vpop.f32.mrf.mxu0
      %v530 = vadd.f32 %v329, %v529
      %v531 = vpop.f32.mrf.mxu0
      %v532 = vadd.f32 %v329, %v531
      %533 = vmatmul.bf16.gmra.mxu0 %v405
      %v534 = vpop.f32.mrf.mxu0
      %v535 = vadd.f32 %v329, %v534
      %v536 = vpop.f32.mrf.mxu0
      %v537 = vadd.f32 %v329, %v536
      %538 = vmatmul.bf16.gmra.mxu0 %v406
      %v539 = vpop.f32.mrf.mxu0
      %v540 = vadd.f32 %v329, %v539
      %v541 = vpop.f32.mrf.mxu0
      %v542 = vadd.f32 %v329, %v541
      %543 = vmatmul.bf16.gmra.mxu0 %v407
      %v544 = vpop.f32.mrf.mxu0
      %v545 = vadd.f32 %v329, %v544
      %v546 = vpop.f32.mrf.mxu0
      %v547 = vadd.f32 %v329, %v546
      %548 = vmatmul.bf16.gmra.mxu0 %v408
      %v549 = vpop.f32.mrf.mxu0
      %v550 = vadd.f32 %v329, %v549
      %v551 = vpop.f32.mrf.mxu0
      %v552 = vadd.f32 %v329, %v551
      %553 = vmatmul.bf16.gmra.mxu0 %v409
      %v554 = vpop.f32.mrf.mxu0
      %v555 = vadd.f32 %v329, %v554
      %v556 = vpop.f32.mrf.mxu0
      %v557 = vadd.f32 %v329, %v556
      %558 = vmatmul.bf16.gmra.mxu0 %v410
      %v559 = vpop.f32.mrf.mxu0
      %v560 = vadd.f32 %v329, %v559
      %v561 = vpop.f32.mrf.mxu0
      %v562 = vadd.f32 %v329, %v561
      %563 = vdwg.mxu0
      %v564 = vpack.c.bf16 %v487, %v485
      %v565 = vpack.c.bf16 %v492, %v490
      %v566 = vpack.c.bf16 %v497, %v495
      %v567 = vpack.c.bf16 %v502, %v500
      %v568 = vpack.c.bf16 %v507, %v505
      %v569 = vpack.c.bf16 %v512, %v510
      %v570 = vpack.c.bf16 %v517, %v515
      %v571 = vpack.c.bf16 %v522, %v520
      %v572 = vpack.c.bf16 %v527, %v525
      %v573 = vpack.c.bf16 %v532, %v530
      %v574 = vpack.c.bf16 %v537, %v535
      %v575 = vpack.c.bf16 %v542, %v540
      %v576 = vpack.c.bf16 %v547, %v545
      %v577 = vpack.c.bf16 %v552, %v550
      %v578 = vpack.c.bf16 %v557, %v555
      %v579 = vpack.c.bf16 %v562, %v560
      %v580 = vld [vmem:[%s266] sm:$0xf]
      %v581 = vld [vmem:[%s266 + $0x4] sm:$0xf]
      %v582 = vld [vmem:[%s266 + $0x8] sm:$0xf]
      %v583 = vld [vmem:[%s266 + $0xc] sm:$0xf]
      %v584 = vld [vmem:[%s266 + $0x10] sm:$0xf]
      %v585 = vld [vmem:[%s266 + $0x14] sm:$0xf]
      %v586 = vld [vmem:[%s266 + $0x18] sm:$0xf]
      %v587 = vld [vmem:[%s266 + $0x1c] sm:$0xf]
      %v588 = vld [vmem:[%s266 + $0x20] sm:$0xf]
      %v589 = vld [vmem:[%s266 + $0x24] sm:$0xf]
      %v590 = vld [vmem:[%s266 + $0x28] sm:$0xf]
      %v591 = vld [vmem:[%s266 + $0x2c] sm:$0xf]
      %v592 = vld [vmem:[%s266 + $0x30] sm:$0xf]
      %v593 = vld [vmem:[%s266 + $0x34] sm:$0xf]
      %v594 = vld [vmem:[%s266 + $0x38] sm:$0xf]
      %v595 = vld [vmem:[%s266 + $0x3c] sm:$0xf]
      %v596 = vld [vmem:[%s269] sm:$0x1]
      %v598 = vperm.slane %v596, 0
      %v616 = vunpack.c.l.b16 %v580
      %v617 = vunpack.c.l.b16 %v581
      %v618 = vunpack.c.l.b16 %v582
      %v619 = vunpack.c.l.b16 %v583
      %v620 = vunpack.c.l.b16 %v584
      %v621 = vunpack.c.l.b16 %v585
      %v622 = vunpack.c.l.b16 %v586
      %v623 = vunpack.c.l.b16 %v587
      %v624 = vunpack.c.l.b16 %v588
      %v625 = vunpack.c.l.b16 %v589
      %v626 = vunpack.c.l.b16 %v590
      %v627 = vunpack.c.l.b16 %v591
      %v628 = vunpack.c.l.b16 %v592
      %v629 = vunpack.c.l.b16 %v593
      %v630 = vunpack.c.l.b16 %v594
      %v631 = vunpack.c.l.b16 %v595
      %v632 = vpack.c.b16 %v617, %v616
      %v633 = vpack.c.b16 %v619, %v618
      %v634 = vpack.c.b16 %v621, %v620
      %v635 = vpack.c.b16 %v623, %v622
      %v636 = vpack.c.b16 %v625, %v624
      %v637 = vpack.c.b16 %v627, %v626
      %v638 = vpack.c.b16 %v629, %v628
      %v639 = vpack.c.b16 %v631, %v630
      %648 = vmatpush.bf16.msra.mxu0 %v639
      %649 = vmatpush.bf16.msra.mxu0 %v638
      %650 = vmatpush.bf16.msra.mxu0 %v637
      %651 = vmatpush.bf16.msra.mxu0 %v636
      %652 = vmatpush.bf16.msra.mxu0 %v635
      %653 = vmatpush.bf16.msra.mxu0 %v634
      %654 = vmatpush.bf16.msra.mxu0 %v633
      %655 = vmatpush.bf16.msra.mxu0 %v632
      %656 = vmatmul.bf16.gmra.mxu0 %v564
      %v657 = vpop.f32.mrf.mxu0
      %v658 = vadd.f32 %v598, %v657
      %v659 = vpop.f32.mrf.mxu0
      %v660 = vadd.f32 %v598, %v659
      %661 = vmatmul.bf16.gmra.mxu0 %v565
      %v662 = vpop.f32.mrf.mxu0
      %v663 = vadd.f32 %v598, %v662
      %v664 = vpop.f32.mrf.mxu0
      %v665 = vadd.f32 %v598, %v664
      %666 = vmatmul.bf16.gmra.mxu0 %v566
      %v667 = vpop.f32.mrf.mxu0
      %v668 = vadd.f32 %v598, %v667
      %v669 = vpop.f32.mrf.mxu0
      %v670 = vadd.f32 %v598, %v669
      %671 = vmatmul.bf16.gmra.mxu0 %v567
      %v672 = vpop.f32.mrf.mxu0
      %v673 = vadd.f32 %v598, %v672
      %v674 = vpop.f32.mrf.mxu0
      %v675 = vadd.f32 %v598, %v674
      %676 = vmatmul.bf16.gmra.mxu0 %v568
      %v677 = vpop.f32.mrf.mxu0
      %v678 = vadd.f32 %v598, %v677
      %v679 = vpop.f32.mrf.mxu0
      %v680 = vadd.f32 %v598, %v679
      %681 = vmatmul.bf16.gmra.mxu0 %v569
      %v682 = vpop.f32.mrf.mxu0
      %v683 = vadd.f32 %v598, %v682
      %v684 = vpop.f32.mrf.mxu0
      %v685 = vadd.f32 %v598, %v684
      %686 = vmatmul.bf16.gmra.mxu0 %v570
      %v687 = vpop.f32.mrf.mxu0
      %v688 = vadd.f32 %v598, %v687
      %v689 = vpop.f32.mrf.mxu0
      %v690 = vadd.f32 %v598, %v689
      %691 = vmatmul.bf16.gmra.mxu0 %v571
      %v692 = vpop.f32.mrf.mxu0
      %v693 = vadd.f32 %v598, %v692
      %v694 = vpop.f32.mrf.mxu0
      %v695 = vadd.f32 %v598, %v694
      %696 = vmatmul.bf16.gmra.mxu0 %v572
      %v697 = vpop.f32.mrf.mxu0
      %v698 = vadd.f32 %v598, %v697
      %v699 = vpop.f32.mrf.mxu0
      %v700 = vadd.f32 %v598, %v699
      %701 = vmatmul.bf16.gmra.mxu0 %v573
      %v702 = vpop.f32.mrf.mxu0
      %v703 = vadd.f32 %v598, %v702
      %v704 = vpop.f32.mrf.mxu0
      %v705 = vadd.f32 %v598, %v704
      %706 = vmatmul.bf16.gmra.mxu0 %v574
      %v707 = vpop.f32.mrf.mxu0
      %v708 = vadd.f32 %v598, %v707
      %v709 = vpop.f32.mrf.mxu0
      %v710 = vadd.f32 %v598, %v709
      %711 = vmatmul.bf16.gmra.mxu0 %v575
      %v712 = vpop.f32.mrf.mxu0
      %v713 = vadd.f32 %v598, %v712
      %v714 = vpop.f32.mrf.mxu0
      %v715 = vadd.f32 %v598, %v714
      %716 = vmatmul.bf16.gmra.mxu0 %v576
      %v717 = vpop.f32.mrf.mxu0
      %v718 = vadd.f32 %v598, %v717
      %v719 = vpop.f32.mrf.mxu0
      %v720 = vadd.f32 %v598, %v719
      %721 = vmatmul.bf16.gmra.mxu0 %v577
      %v722 = vpop.f32.mrf.mxu0
      %v723 = vadd.f32 %v598, %v722
      %v724 = vpop.f32.mrf.mxu0
      %v725 = vadd.f32 %v598, %v724
      %726 = vmatmul.bf16.gmra.mxu0 %v578
      %v727 = vpop.f32.mrf.mxu0
      %v728 = vadd.f32 %v598, %v727
      %v729 = vpop.f32.mrf.mxu0
      %v730 = vadd.f32 %v598, %v729
      %731 = vmatmul.bf16.gmra.mxu0 %v579
      %v732 = vpop.f32.mrf.mxu0
      %v733 = vadd.f32 %v598, %v732
      %v734 = vpop.f32.mrf.mxu0
      %v735 = vadd.f32 %v598, %v734
      %736 = vdwg.mxu0
      %737 = vst [vmem:[%s277] sm:$0xff] %v658
      %738 = vst [vmem:[%s277 + $0x8] sm:$0xff] %v660
      %739 = vst [vmem:[%s277 + $0x10] sm:$0xff] %v663
      %740 = vst [vmem:[%s277 + $0x18] sm:$0xff] %v665
      %741 = vst [vmem:[%s277 + $0x20] sm:$0xff] %v668
      %742 = vst [vmem:[%s277 + $0x28] sm:$0xff] %v670
      %743 = vst [vmem:[%s277 + $0x30] sm:$0xff] %v673
      %744 = vst [vmem:[%s277 + $0x38] sm:$0xff] %v675
      %745 = vst [vmem:[%s277 + $0x40] sm:$0xff] %v678
      %746 = vst [vmem:[%s277 + $0x48] sm:$0xff] %v680
      %747 = vst [vmem:[%s277 + $0x50] sm:$0xff] %v683
      %748 = vst [vmem:[%s277 + $0x58] sm:$0xff] %v685
      %749 = vst [vmem:[%s277 + $0x60] sm:$0xff] %v688
      %750 = vst [vmem:[%s277 + $0x68] sm:$0xff] %v690
      %751 = vst [vmem:[%s277 + $0x70] sm:$0xff] %v693
      %752 = vst [vmem:[%s277 + $0x78] sm:$0xff] %v695
      %753 = vst [vmem:[%s277 + $0x80] sm:$0xff] %v698
      %754 = vst [vmem:[%s277 + $0x88] sm:$0xff] %v700
      %755 = vst [vmem:[%s277 + $0x90] sm:$0xff] %v703
      %756 = vst [vmem:[%s277 + $0x98] sm:$0xff] %v705
      %757 = vst [vmem:[%s277 + $0xa0] sm:$0xff] %v708
      %758 = vst [vmem:[%s277 + $0xa8] sm:$0xff] %v710
      %759 = vst [vmem:[%s277 + $0xb0] sm:$0xff] %v713
      %760 = vst [vmem:[%s277 + $0xb8] sm:$0xff] %v715
      %761 = vst [vmem:[%s277 + $0xc0] sm:$0xff] %v718
      %762 = vst [vmem:[%s277 + $0xc8] sm:$0xff] %v720
      %763 = vst [vmem:[%s277 + $0xd0] sm:$0xff] %v723
      %764 = vst [vmem:[%s277 + $0xd8] sm:$0xff] %v725
      %765 = vst [vmem:[%s277 + $0xe0] sm:$0xff] %v728
      %766 = vst [vmem:[%s277 + $0xe8] sm:$0xff] %v730
      %767 = vst [vmem:[%s277 + $0xf0] sm:$0xff] %v733
      %768 = vst [vmem:[%s277 + $0xf8] sm:$0xff] %v735
      %s769 = smul.u32 32, %s20
      %p770 = scmp.lt.s32.totalorder %s769, 63
      %s771 = scalar_select %p770, %s769, 63
      %p772 = scmp.lt.s32.totalorder %s21, 0
      %s773 = scalar_select %p772, %s21, 0
      %s774 = sadd.s32 %s773, %s771
      %s775 = smul.addr %s774, 8
      %s776 = scalar_lea.vmem %s5, %s775
      // Predicated region
      $region41: #{classblock_forward.1} parent=39 // pred_check
        %p777 = pneg %p168
      $region42: #{classblock_forward.1} parent=39 // pred_check_branch
        %779 = sbr.rel (%p777) target = $region44
      $region43: #{classblock_forward.1} parent=39 // pred_region
        %s780 = smul.u32 32, %s20
      $region44: #{classblock_forward.1} parent=39 // pred_fallthru
        _
    $region40: #{classblock_forward.1} parent=5 // pred_fallthru
      _
    %p781 = scmp.le.s32.totalorder 2, %s11
    // Predicated region
    $region45: #{classblock_forward.1} parent=5 // pred_check
      %p782 = pneg %p781
    $region46: #{classblock_forward.1} parent=5 // pred_check_branch
      %784 = sbr.rel (%p782) target = $region48
    $region47: #{classblock_forward.1} parent=5 // pred_region
      %s785 = ssub.s32 %s11, 2
      // Predicated region
      $region49: #{classblock_forward.1} parent=47 // pred_check
        %p786 = pneg %p174
      $region50: #{classblock_forward.1} parent=47 // pred_check_branch
        %788 = sbr.rel (%p786) target = $region52
      $region51: #{classblock_forward.1} parent=47 // pred_region
        %s789 = smul.u32 32, %s22
        %p790 = scmp.lt.s32.totalorder %s789, 63
        %s791 = scalar_select %p790, %s789, 63
        %p792 = scmp.lt.s32.totalorder %s23, 0
        %s793 = scalar_select %p792, %s23, 0
        %s794 = sadd.s32 %s793, %s791
        %s795 = smul.addr %s794, 8
        %s796 = scalar_lea.vmem %s5, %s795
      $region52: #{classblock_forward.1} parent=47 // pred_fallthru
        _
    $region48: #{classblock_forward.1} parent=5 // pred_fallthru
      _
  $region6: #{classblock_forward.1} parent=0 // loop_footer
    %s15 = sadd.s32 1, %s11
  $region7: #{classblock_forward.1} parent=0 // loop_footer_branch
    %10 = sbr.rel target = $region3
  $region8: #{classblock_forward.1} parent=0 // loop_exit
    _

</llo_original>
